<compile_context>
chip_gen: v5e
topology: v5e:2x2
jax: 0.10.0
libtpu: 0.0.40
codegen_flags: <defaults>
</compile_context>

<pallas_src>
import jax
import jax.numpy as jnp
from jax.experimental import pallas as pl
from jax.experimental.pallas import tpu as pltpu


# ---------------------------------------------------------------------------
# Pallas kernel: whole-array HBM->HBM DMA copy (no VMEM staging)
# ---------------------------------------------------------------------------
def _dma_copy_kernel(x_ref, o_ref, sem):
    # Single contiguous DMA: read N bytes from the input's HBM buffer and
    # write N bytes to the output's HBM buffer.  No vector loads/stores, no
    # VMEM double buffers, no grid — the DMA engine does all the work.
    cp = pltpu.make_async_copy(x_ref, o_ref, sem)
    cp.start()
    cp.wait()


def _pallas_identity_copy(inp: jax.Array) -> jax.Array:
    """Materialized identity copy: one HBM->HBM DMA (bandwidth-bound on all gens)."""
    nbytes = inp.size * jnp.dtype(inp.dtype).itemsize
    return pl.pallas_call(
        _dma_copy_kernel,
        out_shape=jax.ShapeDtypeStruct(inp.shape, inp.dtype),
        # Leave both operands where they are (HBM for anything non-trivial);
        # the kernel body issues the DMA explicitly.
        in_specs=[pl.BlockSpec(memory_space=pl.ANY)],
        out_specs=pl.BlockSpec(memory_space=pl.ANY),
        scratch_shapes=[pltpu.SemaphoreType.DMA],
        compiler_params=pltpu.CompilerParams(has_side_effects=True),
        # Pure-bandwidth hint for the XLA scheduler: 0 flops, 2N bytes moved.
        cost_estimate=pl.CostEstimate(
            flops=0, transcendentals=0, bytes_accessed=2 * nbytes
        ),
    )(inp)


# ---------------------------------------------------------------------------
# Forward pass
# ---------------------------------------------------------------------------
def parallel_attention_forward(inp: jax.Array, *, materialize: bool = False) -> jax.Array:
    """Pallas-side equivalent of ParallelAttention.forward.

    The reference forward is an empty body (`pass` -> returns None); it
    performs no computation on `inp`.  The default (and fastest possible)
    realisation moves no data at all and returns the input unchanged — no
    kernel can beat the no-op.

    Set materialize=True only if a distinct output buffer is required; that
    costs exactly 2N bytes of HBM traffic (one DMA) on every TPU generation.
    """
    # TODO(synk): the PyTorch forward returns None; returning the (aliased)
    # input is the closest functional-JAX equivalent of "no computation".
    if not materialize:
        return inp
    return _pallas_identity_copy(inp)


if __name__ == "__main__":
    key = jax.random.PRNGKey(0)
    # Small shapes consistent with an attention-style module.  hidden=32 is
    # deliberately NOT 128-lane aligned to exercise the shape-agnostic DMA
    # path (the old kernel would have silently skipped the copy here).
    batch, seq, hidden = 2, 8, 32
    x = jax.random.normal(key, (batch, seq, hidden), dtype=jnp.float32)

    # Faithful forward: a no-op on the input (zero HBM traffic, no kernel).
    y = parallel_attention_forward(x)
    y = jax.block_until_ready(y)
    assert y.shape == x.shape and y.dtype == x.dtype
    assert bool(jnp.all(y == x))

    # Exercise the Pallas DMA-copy path once (materialized identity copy).
    out = parallel_attention_forward(x, materialize=True)
    out = jax.block_until_ready(out)

    # The reference forward performs no computation on the input, so the
    # materialized copy must reproduce the input exactly.
    assert out.shape == x.shape and out.dtype == x.dtype
    assert bool(jnp.all(out == x))

    print("KERNEL_OK")
</pallas_src>

<mosaic_0001>
module attributes {stable_mosaic.version = 11 : i64} {
  func.func @_dma_copy_kernel(%arg0: memref<2x8x32xf32, #tpu.memory_space<any>>, %arg1: memref<2x8x32xf32, #tpu.memory_space<any>>, %arg2: memref<!tpu.dma_semaphore, #tpu.memory_space<semaphore_mem>>) attributes {dimension_semantics = [], scalar_prefetch = 0 : i64, scratch_operands = 1 : i64, tpu.core_type = #tpu.core_type<tc>} {
    tpu.enqueue_dma source(%arg0 : memref<2x8x32xf32, #tpu.memory_space<any>>) target(%arg1 : memref<2x8x32xf32, #tpu.memory_space<any>>) target_semaphore(%arg2 : memref<!tpu.dma_semaphore, #tpu.memory_space<semaphore_mem>>)
    tpu.wait_dma2 semaphore(%arg2 : memref<!tpu.dma_semaphore, #tpu.memory_space<semaphore_mem>>) src(%arg0 : memref<2x8x32xf32, #tpu.memory_space<any>>) dst(%arg1 : memref<2x8x32xf32, #tpu.memory_space<any>>)
    return
  }
}

</mosaic_0001>

<llo_original>
// kernel: tpu_custom_call.1
$region0: #{tpu_custom_call.1}
  #allocation0 [shape = 'u32[]', space=smem, size = 0x4, offset = 0x4, fixed_abs, tag = 'smem constant byte address 0x4 - core index']
  #allocation1 [shape = 'u32[72,128]{1,0:T(1,128)}', space=vmem, size = 0x9000, scoped, tag = 'internal scratch']
  #allocation2 [shape = 's32[1]{0}', space=sflag, size = 0x4, scoped, tag = 'scratch operand']
  #allocation3 [shape = 's32[]', space=sflag, size = 0x4, offset = 0, fixed_abs, tag = 'sflag constant byte address 0x0 - dummy sync flag']
  #allocation4 [shape = 'u32[0]{0}', space=smem, size = 0, offset = 0, fixed_abs, tag = 'smem constant byte address 0x0 - null']
  %s0 = inlined_call_operand.hbm [shape: f32[2,8,32], index: 0, kind: input, shape index: {}]
  %s1 = inlined_call_operand.hbm [shape: f32[2,8,32], index: 1, kind: output, shape index: {}]
  %s2 = sld [smem:[#allocation0]]
  $region2: #{tpu_custom_call.1} parent=0
    _
  %s4 = ssub.s32 1, %s2
  %s5 = scalar_select 0, %s4, %s2
  %s7 = sshll.u32 1, 14
  %s8 = sxor.u32 4294967295, %s7
  %s10 = sshll.u32 %s0, 4
  %s11 = int_to_ptr.hbm [resolvable:$true] %s10
  %s12 = sshll.u32 %s1, 4
  %s13 = int_to_ptr.hbm [resolvable:$true] %s12
  %16 = dma.general %s11, 256, %s13, [#allocation2], [#allocation3], [#allocation4], 0, 0
  %s17 = smul.u32 2, 8
  %s18 = smul.u32 %s17, 1
  %s19 = sshll.u32 %s18, 4
  %20 = dma.done [#allocation2], %s19
  %21 = vsyncmov [#allocation2]
  %s22 = vpop.sfrf %21
  %p23 = scmp.eq.s32.totalorder %s22, 0
  %p24 = pneg %p23
  %26 = shalt.err (%p24)

</llo_original>
